<compile_context>
chip_gen: v5e
topology: v5e:2x2
jax: 0.10.0
libtpu: 0.0.40
codegen_flags: <defaults>
</compile_context>

<pallas_src>
import jax
import jax.numpy as jnp
from jax.experimental import pallas as pl
from jax.experimental.pallas import tpu as pltpu


def _round_up(x: int, m: int) -> int:
    return ((x + m - 1) // m) * m


def _default_elementwise_dtype():
    """bf16 VALU is native on TPU v6e / v7x; keep f32 elsewhere (v5e, interpret)."""
    try:
        kind = jax.devices()[0].device_kind.lower()
    except Exception:
        return jnp.float32
    if ("v6" in kind) or ("v7" in kind) or ("7x" in kind):
        return jnp.bfloat16
    return jnp.float32


def equitrans_kernel(r_ref, t_ref, sr_ref, st_ref, h2_ref, o_ref):
    # r_ref:  (bm, E)     f32            batch tile of the equivariant repr
    # t_ref:  (bm, T)     f32            batch tile of the transformation repr
    # sr_ref: (E, E*T)    ew dtype       0/1 selection matrix (resident)
    # st_ref: (T, E*T)    ew dtype       0/1 selection matrix (resident)
    # h2_ref: (E*T, E)    bf16           rearranged hypernet weight (resident)
    # o_ref:  (bm, E)     f32
    ew = sr_ref.dtype
    r = r_ref[...].astype(ew)
    t = t_ref[...].astype(ew)

    # MXU-based lane expansion (selection matrices are 0/1 -> exact copies):
    #   r_rep[b, k*T + m] = r[b, k],   t_til[b, k*T + m] = t[b, m]
    r_rep = jnp.dot(r, sr_ref[...], preferred_element_type=ew)
    t_til = jnp.dot(t, st_ref[...], preferred_element_type=ew)

    # rt[b, k*T + m] = r[b, k] * t[b, m]  (flattened per-sample outer product).
    rt = (r_rep * t_til).astype(h2_ref.dtype)

    # One MXU matmul per batch tile: (bm, E*T) @ (E*T, E) -> (bm, E), f32 acc.
    out = jnp.dot(rt, h2_ref[...], preferred_element_type=jnp.float32)
    o_ref[...] = out.astype(o_ref.dtype)


def prepare_equitrans(w_h, *, mxu_dtype=jnp.bfloat16, ew_dtype=None):
    """One-time static preparation of the hypernet parameters.

    w_h: (E*E, T) nn.Linear weight (no bias).  Returns a dict with:
      h2  : (E*T, E)  rearranged weight, H2[k*T + m, j] = W_h[j*E + k, m]
      s_r : (E, E*T)  0/1 selection matrix, r @ s_r expands r along lanes
      s_t : (T, E*T)  0/1 selection matrix, t @ s_t tiles t along lanes
      w_h : original f32 weight (used by the small-batch XLA fallback)
    Call once at parameter init, not on every forward.
    """
    n, T = w_h.shape
    E = int(round(n ** 0.5))
    assert E * E == n, "hypernet weight must be (E*E, T)"
    if ew_dtype is None:
        ew_dtype = _default_elementwise_dtype()

    h2 = jnp.transpose(w_h.reshape(E, E, T), (1, 2, 0)).reshape(E * T, E)
    cols = jnp.arange(E * T)
    s_r = (jnp.arange(E)[:, None] == (cols // T)[None, :]).astype(ew_dtype)
    s_t = (jnp.arange(T)[:, None] == (cols % T)[None, :]).astype(ew_dtype)
    return {
        "h2": h2.astype(mxu_dtype),
        "s_r": s_r,
        "s_t": s_t,
        "w_h": jnp.asarray(w_h, jnp.float32),
    }


def equi_trans(r, t, params, *, block_b=1024, min_pallas_batch=128):
    """EquiTrans forward.

    r: (B, E) f32, t: (B, T) f32, params: output of prepare_equitrans().
    block_b: max batch tile (raise to 2048 for very large B if desired).
    min_pallas_batch: below this batch size use the fused XLA path instead.
    """
    B, E = r.shape
    T = t.shape[1]
    h2, s_r, s_t = params["h2"], params["s_r"], params["s_t"]
    assert h2.shape == (E * T, E)
    assert s_r.shape == (E, E * T) and s_t.shape == (T, E * T)

    if B < min_pallas_batch:
        # Tiny batches: pallas_call fixed cost dominates -> plain fused XLA
        # einsum, bit-faithful to the PyTorch forward (f32 weight).
        w3 = (t @ params["w_h"].T).reshape(B, E, E)
        return jnp.einsum("bk,bjk->bj", r, w3)

    # Batch tile: grow with B (overhead amortization / HBM roofline), stay a
    # multiple of 8 sublanes, and keep >=2 grid steps so the "parallel" axis
    # can shard across both v7x TensorCores (no-op for single-TC v5e/v6e).
    block_b = _round_up(block_b, 8)
    bm = max(8, min(block_b, _round_up(pl.cdiv(B, 2), 8)))
    grid_b = pl.cdiv(B, bm)

    # Explicit VMEM budget: double-buffered I/O blocks + resident constants +
    # the (bm, E*T) formation intermediates, with slack.
    ew_bytes = jnp.dtype(s_r.dtype).itemsize
    h2_bytes = jnp.dtype(h2.dtype).itemsize
    per_row = 2 * 4 * (E + T + E)             # double-buffered f32 r, t, out
    per_row += (2 * ew_bytes + h2_bytes) * (E * T)  # r_rep, t_til, rt temporaries
    per_row += 4 * E                          # f32 accumulator
    resident = 2 * ((E + T) * (E * T) * ew_bytes + (E * T) * E * h2_bytes)
    vmem_limit = int(max(32 << 20, bm * per_row + resident + (4 << 20)))

    return pl.pallas_call(
        equitrans_kernel,
        out_shape=jax.ShapeDtypeStruct((B, E), r.dtype),
        grid_spec=pltpu.PrefetchScalarGridSpec(
            num_scalar_prefetch=0,
            grid=(grid_b,),
            in_specs=[
                pl.BlockSpec((bm, E), lambda i: (i, 0)),
                pl.BlockSpec((bm, T), lambda i: (i, 0)),
                # Constant block index -> fetched once, kept resident in VMEM.
                pl.BlockSpec((E, E * T), lambda i: (0, 0)),
                pl.BlockSpec((T, E * T), lambda i: (0, 0)),
                pl.BlockSpec((E * T, E), lambda i: (0, 0)),
            ],
            out_specs=pl.BlockSpec((bm, E), lambda i: (i, 0)),
        ),
        compiler_params=pltpu.CompilerParams(
            dimension_semantics=("parallel",),
            vmem_limit_bytes=vmem_limit,
        ),
    )(r, t, s_r, s_t, h2)


def reference(r, t, w_h):
    """Pure-JAX mirror of the PyTorch forward (for validation)."""
    B, E = r.shape
    all_w = t @ w_h.T                 # (B, E*E)
    w3 = all_w.reshape(B, E, E)       # (B, E_out, E_in)
    return jnp.einsum("bk,bjk->bj", r, w3)


if __name__ == "__main__":
    # Shapes consistent with the module: equi_repr_dim=E, trans_repr_dim=T.
    E, T = 32, 16

    key = jax.random.PRNGKey(0)
    k_w, k_data = jax.random.split(key)
    # Deterministic hypernet weight, nn.Linear-style scale 1/sqrt(fan_in).
    w_h = jax.random.normal(k_w, (E * E, T), dtype=jnp.float32) / jnp.sqrt(T)
    params = prepare_equitrans(w_h)   # once, outside the per-call hot path

    def check(B, *, min_pallas_batch):
        kr, kt = jax.random.split(jax.random.fold_in(k_data, B))
        r = jax.random.normal(kr, (B, E), dtype=jnp.float32)
        t = jax.random.normal(kt, (B, T), dtype=jnp.float32)

        out = jax.block_until_ready(
            equi_trans(r, t, params, min_pallas_batch=min_pallas_batch))
        ref = reference(r, t, w_h)
        assert out.shape == (B, E)
        # bf16 MXU operands with f32 accumulation -> norm-relative tolerance.
        err = jnp.max(jnp.abs(out - ref)) / (jnp.max(jnp.abs(ref)) + 1e-12)
        assert err < 2e-2, f"B={B}: relative error {err} vs reference"

    check(16, min_pallas_batch=0)     # forced Pallas path, 2-step grid
    check(200, min_pallas_batch=0)    # non-divisible tail block (no jnp.pad)
    check(16, min_pallas_batch=128)   # small-B XLA fallback branch

    print("KERNEL_OK")
</pallas_src>

<mosaic_0001>
module attributes {stable_mosaic.version = 11 : i64} {
  func.func @equitrans_kernel(%arg0: i32, %arg1: memref<8x32xf32, #tpu.memory_space<vmem>>, %arg2: memref<8x16xf32, #tpu.memory_space<vmem>>, %arg3: memref<32x512xf32, #tpu.memory_space<vmem>>, %arg4: memref<16x512xf32, #tpu.memory_space<vmem>>, %arg5: memref<512x32xbf16, #tpu.memory_space<vmem>>, %arg6: memref<8x32xf32, #tpu.memory_space<vmem>>) attributes {dimension_semantics = [#tpu.dimension_semantics<parallel>], iteration_bounds = array<i64: 2>, scalar_prefetch = 0 : i64, scratch_operands = 0 : i64, tpu.core_type = #tpu.core_type<tc>, window_params = [{transform_indices = @transform_0, window_bounds = array<i64: 8, 32>}, {transform_indices = @transform_1, window_bounds = array<i64: 8, 16>}, {pipeline_mode = #tpu.pipeline_mode<synchronous>, transform_indices = @transform_2, window_bounds = array<i64: 32, 512>}, {pipeline_mode = #tpu.pipeline_mode<synchronous>, transform_indices = @transform_3, window_bounds = array<i64: 16, 512>}, {pipeline_mode = #tpu.pipeline_mode<synchronous>, transform_indices = @transform_4, window_bounds = array<i64: 512, 32>}, {transform_indices = @transform_5, window_bounds = array<i64: 8, 32>}]} {
    %c0 = arith.constant 0 : index
    %c0_0 = arith.constant 0 : index
    %0 = vector.load %arg1[%c0, %c0_0] : memref<8x32xf32, #tpu.memory_space<vmem>>, vector<8x32xf32>
    %c0_1 = arith.constant 0 : index
    %c0_2 = arith.constant 0 : index
    %1 = vector.load %arg2[%c0_1, %c0_2] : memref<8x16xf32, #tpu.memory_space<vmem>>, vector<8x16xf32>
    %c0_3 = arith.constant 0 : index
    %c0_4 = arith.constant 0 : index
    %2 = vector.load %arg3[%c0_3, %c0_4] : memref<32x512xf32, #tpu.memory_space<vmem>>, vector<32x512xf32>
    %cst = arith.constant dense<0.000000e+00> : vector<8x512xf32>
    %3 = tpu.matmul %0, %2, %cst {dimension_numbers = #tpu.dot_dimension_numbers<[1], [0], [0], [1], [0, 0, 1, 1], [], []>} : vector<8x32xf32>, vector<32x512xf32>, vector<8x512xf32> -> vector<8x512xf32>
    %c0_5 = arith.constant 0 : index
    %c0_6 = arith.constant 0 : index
    %4 = vector.load %arg4[%c0_5, %c0_6] : memref<16x512xf32, #tpu.memory_space<vmem>>, vector<16x512xf32>
    %cst_7 = arith.constant dense<0.000000e+00> : vector<8x512xf32>
    %5 = tpu.matmul %1, %4, %cst_7 {dimension_numbers = #tpu.dot_dimension_numbers<[1], [0], [0], [1], [0, 0, 1, 1], [], []>} : vector<8x16xf32>, vector<16x512xf32>, vector<8x512xf32> -> vector<8x512xf32>
    %6 = arith.mulf %3, %5 : vector<8x512xf32>
    %7 = arith.truncf %6 : vector<8x512xf32> to vector<8x512xbf16>
    %c0_8 = arith.constant 0 : index
    %c0_9 = arith.constant 0 : index
    %8 = vector.load %arg5[%c0_8, %c0_9] : memref<512x32xbf16, #tpu.memory_space<vmem>>, vector<512x32xbf16>
    %cst_10 = arith.constant dense<0.000000e+00> : vector<8x32xf32>
    %9 = tpu.matmul %7, %8, %cst_10 {dimension_numbers = #tpu.dot_dimension_numbers<[1], [0], [0], [1], [0, 0, 1, 1], [], []>} : vector<8x512xbf16>, vector<512x32xbf16>, vector<8x32xf32> -> vector<8x32xf32>
    %c0_11 = arith.constant 0 : index
    %c0_12 = arith.constant 0 : index
    %10 = vector.load %arg6[%c0_11, %c0_12] : memref<8x32xf32, #tpu.memory_space<vmem>>, vector<8x32xf32>
    tpu.vector_store %arg6[%c0_11, %c0_12], %9 {strides = array<i32>} : memref<8x32xf32, #tpu.memory_space<vmem>>, vector<8x32xf32>,
    return
  }
  func.func @transform_0(%arg0: i32) -> (i32, i32) {
    %c0_i32 = arith.constant 0 : i32
    %c0_i32_0 = arith.constant 0 : i32
    return %arg0, %c0_i32 : i32, i32
  }
  func.func @transform_1(%arg0: i32) -> (i32, i32) {
    %c0_i32 = arith.constant 0 : i32
    %c0_i32_0 = arith.constant 0 : i32
    return %arg0, %c0_i32 : i32, i32
  }
  func.func @transform_2(%arg0: i32) -> (i32, i32) {
    %c0_i32 = arith.constant 0 : i32
    %c0_i32_0 = arith.constant 0 : i32
    %c0_i32_1 = arith.constant 0 : i32
    return %c0_i32, %c0_i32_0 : i32, i32
  }
  func.func @transform_3(%arg0: i32) -> (i32, i32) {
    %c0_i32 = arith.constant 0 : i32
    %c0_i32_0 = arith.constant 0 : i32
    %c0_i32_1 = arith.constant 0 : i32
    return %c0_i32, %c0_i32_0 : i32, i32
  }
  func.func @transform_4(%arg0: i32) -> (i32, i32) {
    %c0_i32 = arith.constant 0 : i32
    %c0_i32_0 = arith.constant 0 : i32
    %c0_i32_1 = arith.constant 0 : i32
    return %c0_i32, %c0_i32_0 : i32, i32
  }
  func.func @transform_5(%arg0: i32) -> (i32, i32) {
    %c0_i32 = arith.constant 0 : i32
    %c0_i32_0 = arith.constant 0 : i32
    return %arg0, %c0_i32 : i32, i32
  }
}

</mosaic_0001>

<llo_original>
// kernel: tpu_custom_call.1
$region0: #{tpu_custom_call.1}
  #allocation0 [shape = 'u32[]', space=smem, size = 0x4, offset = 0x4, fixed_abs, tag = 'smem constant byte address 0x4 - core index']
  #allocation1 [shape = 'u32[72,128]{1,0:T(1,128)}', space=vmem, size = 0x9000, scoped, tag = 'internal scratch']
  %s0 = inlined_call_operand.vmem [shape: f32[16,32], index: 0, kind: input, shape index: {}]
  %s1 = inlined_call_operand.vmem [shape: f32[16,16], index: 1, kind: input, shape index: {}]
  %s2 = inlined_call_operand.vmem [shape: f32[32,512], index: 2, kind: input, shape index: {}]
  %s3 = inlined_call_operand.vmem [shape: f32[16,512], index: 3, kind: input, shape index: {}]
  %s4 = inlined_call_operand.vmem [shape: bf16[512,32], index: 4, kind: input, shape index: {}]
  %s5 = inlined_call_operand.hbm [shape: f32[16,32], index: 5, kind: output, shape index: {}]
  %s6 = sld [smem:[#allocation0]]
  $region53: #{tpu_custom_call.1} parent=0
    _
  %s8 = ssub.s32 1, %s6
  %s9 = scalar_select 0, %s8, %s6
  $region1: #{tpu_custom_call.1} parent=0
    #allocation2 [shape = 'u8[8192]{0}', space=vmem, size = 0x2000, scoped, tag = 'output window, operand 0']
    #allocation3 [shape = 's32[2]{0}', space=sflag, size = 0x8, scoped, tag = 'scoped memory for tpu_custom_call.1']
    %10 = vsyncpa [#allocation3], 0
    %s11 = scalar_lea.sflag [#allocation3], 1
    %12 = vsyncpa %s11, 0
    loop: start=0, step=1, limit=4
    $region2: #{tpu_custom_call.1} parent=1 // loop_pre_header
      _
    $region3: #{tpu_custom_call.1} parent=1 // loop_header
      %s14 = sphi 0, %s18
      %p15 = scmp.ge.s32.totalorder %s14, 4
      %s24 = sphi 0, %s26
      %s27 = sphi 0, %s24
      %s28 = sphi 0, %s27
      %s44 = sphi 0, %s28
      %s50 = sphi 0, %s52
      %s53 = sphi 0, %s50
      %s54 = sphi 0, %s53
      %s70 = sphi 0, %s54
      %s74 = sphi 0, %s74
      %s76 = sphi 0, %s74
      %s77 = sphi 0, %s76
      %s91 = sphi 0, %s77
      %s95 = sphi 0, %s95
      %s97 = sphi 0, %s95
      %s98 = sphi 0, %s97
      %s112 = sphi 0, %s98
      %s116 = sphi 0, %s116
      %s118 = sphi 0, %s116
      %s119 = sphi 0, %s118
      %s133 = sphi 0, %s119
      %s139 = sphi 0, %s141
      %s142 = sphi 0, %s139
      %s143 = sphi 0, %s142
      %s159 = sphi 0, %s143
    $region4: #{tpu_custom_call.1} parent=1 // loop_header_branch
      %17 = sbr.rel (%p15) target = $region8
    $region5: #{tpu_custom_call.1} parent=1 // loop_body
      %s19 = ssub.s32 %s14, 1
      %s20 = ssub.s32 %s14, 2
      %s21 = sadd.s32 %s14, 1
      %s22 = ssub.s32 %s14, %s21
      %p23 = scmp.eq.s32.totalorder %s22, 0
      %s25 = sadd.s32 %s24, 1
      %s26 = scalar_select %p23, %s24, %s25
      %p29 = pneg %p23
      %p30 = scmp.eq.s32.totalorder %s14, 1
      %p31 = por %p29, %p30
      %p32 = scmp.ne.s32.totalorder %s24, %s27
      %p33 = scmp.eq.s32.totalorder %s14, 0
      %p34 = por %p32, %p33
      %p35 = scmp.ne.s32.totalorder %s24, %s27
      %p36 = scmp.eq.s32.totalorder %s19, 1
      %p37 = por %p35, %p36
      %p38 = scmp.ne.s32.totalorder %s27, %s28
      %p39 = scmp.eq.s32.totalorder %s19, 0
      %p40 = por %p38, %p39
      %p41 = scmp.ne.s32.totalorder %s27, %s28
      %p42 = scmp.eq.s32.totalorder %s20, 1
      %p43 = por %p41, %p42
      %p45 = scmp.ne.s32.totalorder %s28, %s44
      %p46 = scmp.eq.s32.totalorder %s20, 0
      %p47 = por %p45, %p46
      %s48 = ssub.s32 %s14, %s21
      %p49 = scmp.eq.s32.totalorder %s48, 0
      %s51 = sadd.s32 %s50, 1
      %s52 = scalar_select %p49, %s50, %s51
      %p55 = pneg %p49
      %p56 = scmp.eq.s32.totalorder %s14, 1
      %p57 = por %p55, %p56
      %p58 = scmp.ne.s32.totalorder %s50, %s53
      %p59 = scmp.eq.s32.totalorder %s14, 0
      %p60 = por %p58, %p59
      %p61 = scmp.ne.s32.totalorder %s50, %s53
      %p62 = scmp.eq.s32.totalorder %s19, 1
      %p63 = por %p61, %p62
      %p64 = scmp.ne.s32.totalorder %s53, %s54
      %p65 = scmp.eq.s32.totalorder %s19, 0
      %p66 = por %p64, %p65
      %p67 = scmp.ne.s32.totalorder %s53, %s54
      %p68 = scmp.eq.s32.totalorder %s20, 1
      %p69 = por %p67, %p68
      %p71 = scmp.ne.s32.totalorder %s54, %s70
      %p72 = scmp.eq.s32.totalorder %s20, 0
      %p73 = por %p71, %p72
      %s75 = sadd.s32 %s74, 1
      %p78 = scmp.eq.s32.totalorder %s14, 1
      %p79 = scmp.ne.s32.totalorder %s74, %s76
      %p80 = scmp.eq.s32.totalorder %s14, 0
      %p81 = por %p79, %p80
      %p82 = scmp.ne.s32.totalorder %s74, %s76
      %p83 = scmp.eq.s32.totalorder %s19, 1
      %p84 = por %p82, %p83
      %p85 = scmp.ne.s32.totalorder %s76, %s77
      %p86 = scmp.eq.s32.totalorder %s19, 0
      %p87 = por %p85, %p86
      %p88 = scmp.ne.s32.totalorder %s76, %s77
      %p89 = scmp.eq.s32.totalorder %s20, 1
      %p90 = por %p88, %p89
      %p92 = scmp.ne.s32.totalorder %s77, %s91
      %p93 = scmp.eq.s32.totalorder %s20, 0
      %p94 = por %p92, %p93
      %s96 = sadd.s32 %s95, 1
      %p99 = scmp.eq.s32.totalorder %s14, 1
      %p100 = scmp.ne.s32.totalorder %s95, %s97
      %p101 = scmp.eq.s32.totalorder %s14, 0
      %p102 = por %p100, %p101
      %p103 = scmp.ne.s32.totalorder %s95, %s97
      %p104 = scmp.eq.s32.totalorder %s19, 1
      %p105 = por %p103, %p104
      %p106 = scmp.ne.s32.totalorder %s97, %s98
      %p107 = scmp.eq.s32.totalorder %s19, 0
      %p108 = por %p106, %p107
      %p109 = scmp.ne.s32.totalorder %s97, %s98
      %p110 = scmp.eq.s32.totalorder %s20, 1
      %p111 = por %p109, %p110
      %p113 = scmp.ne.s32.totalorder %s98, %s112
      %p114 = scmp.eq.s32.totalorder %s20, 0
      %p115 = por %p113, %p114
      %s117 = sadd.s32 %s116, 1
      %p120 = scmp.eq.s32.totalorder %s14, 1
      %p121 = scmp.ne.s32.totalorder %s116, %s118
      %p122 = scmp.eq.s32.totalorder %s14, 0
      %p123 = por %p121, %p122
      %p124 = scmp.ne.s32.totalorder %s116, %s118
      %p125 = scmp.eq.s32.totalorder %s19, 1
      %p126 = por %p124, %p125
      %p127 = scmp.ne.s32.totalorder %s118, %s119
      %p128 = scmp.eq.s32.totalorder %s19, 0
      %p129 = por %p127, %p128
      %p130 = scmp.ne.s32.totalorder %s118, %s119
      %p131 = scmp.eq.s32.totalorder %s20, 1
      %p132 = por %p130, %p131
      %p134 = scmp.ne.s32.totalorder %s119, %s133
      %p135 = scmp.eq.s32.totalorder %s20, 0
      %p136 = por %p134, %p135
      %s137 = ssub.s32 %s14, %s21
      %p138 = scmp.eq.s32.totalorder %s137, 0
      %s140 = sadd.s32 %s139, 1
      %s141 = scalar_select %p138, %s139, %s140
      %p144 = pneg %p138
      %p145 = scmp.eq.s32.totalorder %s14, 1
      %p146 = por %p144, %p145
      %p147 = scmp.ne.s32.totalorder %s139, %s142
      %p148 = scmp.eq.s32.totalorder %s14, 0
      %p149 = por %p147, %p148
      %p150 = scmp.ne.s32.totalorder %s139, %s142
      %p151 = scmp.eq.s32.totalorder %s19, 1
      %p152 = por %p150, %p151
      %p153 = scmp.ne.s32.totalorder %s142, %s143
      %p154 = scmp.eq.s32.totalorder %s19, 0
      %p155 = por %p153, %p154
      %p156 = scmp.ne.s32.totalorder %s142, %s143
      %p157 = scmp.eq.s32.totalorder %s20, 1
      %p158 = por %p156, %p157
      %p160 = scmp.ne.s32.totalorder %s143, %s159
      %p161 = scmp.eq.s32.totalorder %s20, 0
      %p162 = por %p160, %p161
      %p163 = scmp.le.s32.totalorder 1, %s14
      %p164 = scmp.lt.s32.totalorder %s14, 3
      %p165 = pnand %p163, %p164
      %p166 = pneg %p165
      // Predicated region
      $region9: #{tpu_custom_call.1} parent=5 // pred_check
        _
      $region10: #{tpu_custom_call.1} parent=5 // pred_check_branch
        %168 = sbr.rel (%p165) target = $region12
      $region11: #{tpu_custom_call.1} parent=5 // pred_region
        %s169 = ssub.s32 %s14, 1
        // Predicated region
        $region13: #{tpu_custom_call.1} parent=11 // pred_check
          %p170 = pneg %p87
        $region14: #{tpu_custom_call.1} parent=11 // pred_check_branch
          %172 = sbr.rel (%p170) target = $region16
        $region15: #{tpu_custom_call.1} parent=11 // pred_region
          _
        $region16: #{tpu_custom_call.1} parent=11 // pred_fallthru
          _
        // Predicated region
        $region17: #{tpu_custom_call.1} parent=11 // pred_check
          %p173 = pneg %p108
        $region18: #{tpu_custom_call.1} parent=11 // pred_check_branch
          %175 = sbr.rel (%p173) target = $region20
        $region19: #{tpu_custom_call.1} parent=11 // pred_region
          _
        $region20: #{tpu_custom_call.1} parent=11 // pred_fallthru
          _
        // Predicated region
        $region21: #{tpu_custom_call.1} parent=11 // pred_check
          %p176 = pneg %p129
        $region22: #{tpu_custom_call.1} parent=11 // pred_check_branch
          %178 = sbr.rel (%p176) target = $region24
        $region23: #{tpu_custom_call.1} parent=11 // pred_region
          _
        $region24: #{tpu_custom_call.1} parent=11 // pred_fallthru
          _
      $region12: #{tpu_custom_call.1} parent=5 // pred_fallthru
        _
      %p179 = scmp.lt.s32.totalorder %s14, 2
      // Predicated region
      $region25: #{tpu_custom_call.1} parent=5 // pred_check
        %p180 = pneg %p179
      $region26: #{tpu_custom_call.1} parent=5 // pred_check_branch
        %182 = sbr.rel (%p180) target = $region28
      $region27: #{tpu_custom_call.1} parent=5 // pred_region
        // Predicated region
        $region29: #{tpu_custom_call.1} parent=27 // pred_check
          %p183 = pneg %p34
        $region30: #{tpu_custom_call.1} parent=27 // pred_check_branch
          %185 = sbr.rel (%p183) target = $region32
        $region31: #{tpu_custom_call.1} parent=27 // pred_region
          %p186 = scmp.lt.s32.totalorder %s14, 1
          %s187 = scalar_select %p186, %s14, 1
          %s188 = smul.addr %s187, 8
          %s189 = scalar_lea.vmem %s0, %s188
        $region32: #{tpu_custom_call.1} parent=27 // pred_fallthru
          _
        // Predicated region
        $region33: #{tpu_custom_call.1} parent=27 // pred_check
          %p190 = pneg %p60
        $region34: #{tpu_custom_call.1} parent=27 // pred_check_branch
          %192 = sbr.rel (%p190) target = $region36
        $region35: #{tpu_custom_call.1} parent=27 // pred_region
          %p193 = scmp.lt.s32.totalorder %s14, 1
          %s194 = scalar_select %p193, %s14, 1
          %s195 = smul.addr %s194, 8
          %s196 = scalar_lea.vmem %s1, %s195
        $region36: #{tpu_custom_call.1} parent=27 // pred_fallthru
          _
      $region28: #{tpu_custom_call.1} parent=5 // pred_fallthru
        _
      %p197 = scmp.le.s32.totalorder 1, %s14
      %p198 = scmp.lt.s32.totalorder %s14, 3
      %p199 = pnand %p197, %p198
      %p200 = pneg %p199
      // Predicated region
      $region37: #{tpu_custom_call.1} parent=5 // pred_check
        _
      $region38: #{tpu_custom_call.1} parent=5 // pred_check_branch
        %202 = sbr.rel (%p199) target = $region40
      $region39: #{tpu_custom_call.1} parent=5 // pred_region
        %s203 = ssub.s32 %s14, 1
        %p204 = scmp.lt.s32.totalorder %s19, 1
        %s205 = scalar_select %p204, %s19, 1
        %s206 = smul.addr %s205, 8
        %s207 = scalar_lea.vmem %s0, %s206
        %p208 = pneg %p40
        %p209 = pneg %p37
        %p210 = scmp.lt.s32.totalorder %s19, 1
        %s211 = scalar_select %p210, %s19, 1
        %s212 = smul.addr %s211, 8
        %s213 = scalar_lea.vmem %s1, %s212
        %p214 = pneg %p66
        %p215 = pneg %p63
        %p216 = pneg %p87
        %p217 = pneg %p84
        %p218 = pneg %p108
        %p219 = pneg %p105
        %p220 = pneg %p129
        %p221 = pneg %p126
        %p222 = pneg %p155
        %p223 = pneg %p152
        %s224 = sand.u32 %s142, 1
        %s225 = scalar_lea.sflag [#allocation3], %s224
        %s226 = sand.u32 %s142, 1
        %s227 = smul.addr %s226, 8
        %s228 = scalar_lea.vmem [#allocation2], %s227
        %p229 = scmp.lt.s32.totalorder %s19, 1
        %s230 = scalar_select %p229, %s19, 1
        %s231 = smul.addr %s230, 8
        %s232 = scalar_lea.vmem %s0, %s231
        %p233 = scmp.lt.s32.totalorder %s19, 1
        %s234 = scalar_select %p233, %s19, 1
        %s235 = smul.addr %s234, 8
        %s236 = scalar_lea.vmem %s1, %s235
        %v237 = vld [vmem:[%s232] sm:$0xff]
        %v238 = vld [vmem:[%s236] sm:$0xff]
        %v239 = vld [vmem:[%s2] sm:$0xff]
        %v240 = vld [vmem:[%s2 + $0x8] sm:$0xff]
        %v241 = vld [vmem:[%s2 + $0x10] sm:$0xff]
        %v242 = vld [vmem:[%s2 + $0x18] sm:$0xff]
        %v243 = vld [vmem:[%s2 + $0x20] sm:$0xff]
        %v244 = vld [vmem:[%s2 + $0x28] sm:$0xff]
        %v245 = vld [vmem:[%s2 + $0x30] sm:$0xff]
        %v246 = vld [vmem:[%s2 + $0x38] sm:$0xff]
        %v247 = vld [vmem:[%s2 + $0x40] sm:$0xff]
        %v248 = vld [vmem:[%s2 + $0x48] sm:$0xff]
        %v249 = vld [vmem:[%s2 + $0x50] sm:$0xff]
        %v250 = vld [vmem:[%s2 + $0x58] sm:$0xff]
        %v251 = vld [vmem:[%s2 + $0x60] sm:$0xff]
        %v252 = vld [vmem:[%s2 + $0x68] sm:$0xff]
        %v253 = vld [vmem:[%s2 + $0x70] sm:$0xff]
        %v254 = vld [vmem:[%s2 + $0x78] sm:$0xff]
        %vm255 = vcmask 261120
        %v257 = vsel %vm255, %v237, 0
        %259 = vmatpush.msra.mxu0 0.0
        %260 = vmatpush.msra.mxu0 0.0
        %261 = vmatpush.msra.mxu0 0.0
        %262 = vmatpush.msra.mxu0 0.0
        %263 = vmatpush.msra.mxu0 0.0
        %264 = vmatpush.msra.mxu0 0.0
        %265 = vmatpush.msra.mxu0 0.0
        %266 = vmatpush.msra.mxu0 0.0
        %267 = vmatpush.msra.mxu0 0.0
        %268 = vmatpush.msra.mxu0 0.0
        %269 = vmatpush.msra.mxu0 0.0
        %270 = vmatpush.msra.mxu0 0.0
        %271 = vmatpush.msra.mxu0 %v251
        %272 = vmatpush.msra.mxu0 %v247
        %273 = vmatpush.msra.mxu0 %v243
        %274 = vmatpush.msra.mxu0 %v239
        %275 = vmatmul.f32.gmra.mxu0 %v257
        %v276 = vpop.f32.mrf.mxu0
        %v277 = vadd.f32 0.0, %v276
        %278 = vdwg.mxu0
        %279 = vmatpush.msra.mxu0 0.0
        %280 = vmatpush.msra.mxu0 0.0
        %281 = vmatpush.msra.mxu0 0.0
        %282 = vmatpush.msra.mxu0 0.0
        %283 = vmatpush.msra.mxu0 0.0
        %284 = vmatpush.msra.mxu0 0.0
        %285 = vmatpush.msra.mxu0 0.0
        %286 = vmatpush.msra.mxu0 0.0
        %287 = vmatpush.msra.mxu0 0.0
        %288 = vmatpush.msra.mxu0 0.0
        %289 = vmatpush.msra.mxu0 0.0
        %290 = vmatpush.msra.mxu0 0.0
        %291 = vmatpush.msra.mxu0 %v252
        %292 = vmatpush.msra.mxu0 %v248
        %293 = vmatpush.msra.mxu0 %v244
        %294 = vmatpush.msra.mxu0 %v240
        %295 = vmatmul.f32.gmra.mxu0 %v257
        %v296 = vpop.f32.mrf.mxu0
        %v297 = vadd.f32 0.0, %v296
        %298 = vdwg.mxu0
        %299 = vmatpush.msra.mxu0 0.0
        %300 = vmatpush.msra.mxu0 0.0
        %301 = vmatpush.msra.mxu0 0.0
        %302 = vmatpush.msra.mxu0 0.0
        %303 = vmatpush.msra.mxu0 0.0
        %304 = vmatpush.msra.mxu0 0.0
        %305 = vmatpush.msra.mxu0 0.0
        %306 = vmatpush.msra.mxu0 0.0
        %307 = vmatpush.msra.mxu0 0.0
        %308 = vmatpush.msra.mxu0 0.0
        %309 = vmatpush.msra.mxu0 0.0
        %310 = vmatpush.msra.mxu0 0.0
        %311 = vmatpush.msra.mxu0 %v253
        %312 = vmatpush.msra.mxu0 %v249
        %313 = vmatpush.msra.mxu0 %v245
        %314 = vmatpush.msra.mxu0 %v241
        %315 = vmatmul.f32.gmra.mxu0 %v257
        %v316 = vpop.f32.mrf.mxu0
        %v317 = vadd.f32 0.0, %v316
        %318 = vdwg.mxu0
        %319 = vmatpush.msra.mxu0 0.0
        %320 = vmatpush.msra.mxu0 0.0
        %321 = vmatpush.msra.mxu0 0.0
        %322 = vmatpush.msra.mxu0 0.0
        %323 = vmatpush.msra.mxu0 0.0
        %324 = vmatpush.msra.mxu0 0.0
        %325 = vmatpush.msra.mxu0 0.0
        %326 = vmatpush.msra.mxu0 0.0
        %327 = vmatpush.msra.mxu0 0.0
        %328 = vmatpush.msra.mxu0 0.0
        %329 = vmatpush.msra.mxu0 0.0
        %330 = vmatpush.msra.mxu0 0.0
        %331 = vmatpush.msra.mxu0 %v254
        %332 = vmatpush.msra.mxu0 %v250
        %333 = vmatpush.msra.mxu0 %v246
        %334 = vmatpush.msra.mxu0 %v242
        %335 = vmatmul.f32.gmra.mxu0 %v257
        %v336 = vpop.f32.mrf.mxu0
        %v337 = vadd.f32 0.0, %v336
        %338 = vdwg.mxu0
        %v339 = vld [vmem:[%s3] sm:$0xff]
        %v340 = vld [vmem:[%s3 + $0x8] sm:$0xff]
        %v341 = vld [vmem:[%s3 + $0x10] sm:$0xff]
        %v342 = vld [vmem:[%s3 + $0x18] sm:$0xff]
        %v343 = vld [vmem:[%s3 + $0x20] sm:$0xff]
        %v344 = vld [vmem:[%s3 + $0x28] sm:$0xff]
        %v345 = vld [vmem:[%s3 + $0x30] sm:$0xff]
        %v346 = vld [vmem:[%s3 + $0x38] sm:$0xff]
        %vm347 = vcmask 130048
        %v349 = vsel %vm347, %v238, 0
        %351 = vmatpush.msra.mxu0 0.0
        %352 = vmatpush.msra.mxu0 0.0
        %353 = vmatpush.msra.mxu0 0.0
        %354 = vmatpush.msra.mxu0 0.0
        %355 = vmatpush.msra.mxu0 0.0
        %356 = vmatpush.msra.mxu0 0.0
        %357 = vmatpush.msra.mxu0 0.0
        %358 = vmatpush.msra.mxu0 0.0
        %359 = vmatpush.msra.mxu0 0.0
        %360 = vmatpush.msra.mxu0 0.0
        %361 = vmatpush.msra.mxu0 0.0
        %362 = vmatpush.msra.mxu0 0.0
        %363 = vmatpush.msra.mxu0 0.0
        %364 = vmatpush.msra.mxu0 0.0
        %365 = vmatpush.msra.mxu0 %v343
        %366 = vmatpush.msra.mxu0 %v339
        %367 = vmatmul.f32.gmra.mxu0 %v349
        %v368 = vpop.f32.mrf.mxu0
        %v369 = vadd.f32 0.0, %v368
        %370 = vdwg.mxu0
        %371 = vmatpush.msra.mxu0 0.0
        %372 = vmatpush.msra.mxu0 0.0
        %373 = vmatpush.msra.mxu0 0.0
        %374 = vmatpush.msra.mxu0 0.0
        %375 = vmatpush.msra.mxu0 0.0
        %376 = vmatpush.msra.mxu0 0.0
        %377 = vmatpush.msra.mxu0 0.0
        %378 = vmatpush.msra.mxu0 0.0
        %379 = vmatpush.msra.mxu0 0.0
        %380 = vmatpush.msra.mxu0 0.0
        %381 = vmatpush.msra.mxu0 0.0
        %382 = vmatpush.msra.mxu0 0.0
        %383 = vmatpush.msra.mxu0 0.0
        %384 = vmatpush.msra.mxu0 0.0
        %385 = vmatpush.msra.mxu0 %v344
        %386 = vmatpush.msra.mxu0 %v340
        %387 = vmatmul.f32.gmra.mxu0 %v349
        %v388 = vpop.f32.mrf.mxu0
        %v389 = vadd.f32 0.0, %v388
        %390 = vdwg.mxu0
        %391 = vmatpush.msra.mxu0 0.0
        %392 = vmatpush.msra.mxu0 0.0
        %393 = vmatpush.msra.mxu0 0.0
        %394 = vmatpush.msra.mxu0 0.0
        %395 = vmatpush.msra.mxu0 0.0
        %396 = vmatpush.msra.mxu0 0.0
        %397 = vmatpush.msra.mxu0 0.0
        %398 = vmatpush.msra.mxu0 0.0
        %399 = vmatpush.msra.mxu0 0.0
        %400 = vmatpush.msra.mxu0 0.0
        %401 = vmatpush.msra.mxu0 0.0
        %402 = vmatpush.msra.mxu0 0.0
        %403 = vmatpush.msra.mxu0 0.0
        %404 = vmatpush.msra.mxu0 0.0
        %405 = vmatpush.msra.mxu0 %v345
        %406 = vmatpush.msra.mxu0 %v341
        %407 = vmatmul.f32.gmra.mxu0 %v349
        %v408 = vpop.f32.mrf.mxu0
        %v409 = vadd.f32 0.0, %v408
        %410 = vdwg.mxu0
        %411 = vmatpush.msra.mxu0 0.0
        %412 = vmatpush.msra.mxu0 0.0
        %413 = vmatpush.msra.mxu0 0.0
        %414 = vmatpush.msra.mxu0 0.0
        %415 = vmatpush.msra.mxu0 0.0
        %416 = vmatpush.msra.mxu0 0.0
        %417 = vmatpush.msra.mxu0 0.0
        %418 = vmatpush.msra.mxu0 0.0
        %419 = vmatpush.msra.mxu0 0.0
        %420 = vmatpush.msra.mxu0 0.0
        %421 = vmatpush.msra.mxu0 0.0
        %422 = vmatpush.msra.mxu0 0.0
        %423 = vmatpush.msra.mxu0 0.0
        %424 = vmatpush.msra.mxu0 0.0
        %425 = vmatpush.msra.mxu0 %v346
        %426 = vmatpush.msra.mxu0 %v342
        %427 = vmatmul.f32.gmra.mxu0 %v349
        %v428 = vpop.f32.mrf.mxu0
        %v429 = vadd.f32 0.0, %v428
        %430 = vdwg.mxu0
        %v431 = vmul.f32 %v277, %v369
        %v432 = vmul.f32 %v297, %v389
        %v433 = vmul.f32 %v317, %v409
        %v434 = vmul.f32 %v337, %v429
        %v435 = vpack.c.bf16 %v431, %v431
        %v436 = vpack.c.bf16 %v432, %v432
        %v437 = vpack.c.bf16 %v433, %v433
        %v438 = vpack.c.bf16 %v434, %v434
        %v439 = vld [vmem:[%s4] sm:$0xf]
        %v440 = vld [vmem:[%s4 + $0x4] sm:$0xf]
        %v441 = vld [vmem:[%s4 + $0x8] sm:$0xf]
        %v442 = vld [vmem:[%s4 + $0xc] sm:$0xf]
        %v443 = vld [vmem:[%s4 + $0x10] sm:$0xf]
        %v444 = vld [vmem:[%s4 + $0x14] sm:$0xf]
        %v445 = vld [vmem:[%s4 + $0x18] sm:$0xf]
        %v446 = vld [vmem:[%s4 + $0x1c] sm:$0xf]
        %v447 = vld [vmem:[%s4 + $0x20] sm:$0xf]
        %v448 = vld [vmem:[%s4 + $0x24] sm:$0xf]
        %v449 = vld [vmem:[%s4 + $0x28] sm:$0xf]
        %v450 = vld [vmem:[%s4 + $0x2c] sm:$0xf]
        %v451 = vld [vmem:[%s4 + $0x30] sm:$0xf]
        %v452 = vld [vmem:[%s4 + $0x34] sm:$0xf]
        %v453 = vld [vmem:[%s4 + $0x38] sm:$0xf]
        %v454 = vld [vmem:[%s4 + $0x3c] sm:$0xf]
        %v455 = vld [vmem:[%s4 + $0x40] sm:$0xf]
        %v456 = vld [vmem:[%s4 + $0x44] sm:$0xf]
        %v457 = vld [vmem:[%s4 + $0x48] sm:$0xf]
        %v458 = vld [vmem:[%s4 + $0x4c] sm:$0xf]
        %v459 = vld [vmem:[%s4 + $0x50] sm:$0xf]
        %v460 = vld [vmem:[%s4 + $0x54] sm:$0xf]
        %v461 = vld [vmem:[%s4 + $0x58] sm:$0xf]
        %v462 = vld [vmem:[%s4 + $0x5c] sm:$0xf]
        %v463 = vld [vmem:[%s4 + $0x60] sm:$0xf]
        %v464 = vld [vmem:[%s4 + $0x64] sm:$0xf]
        %v465 = vld [vmem:[%s4 + $0x68] sm:$0xf]
        %v466 = vld [vmem:[%s4 + $0x6c] sm:$0xf]
        %v467 = vld [vmem:[%s4 + $0x70] sm:$0xf]
        %v468 = vld [vmem:[%s4 + $0x74] sm:$0xf]
        %v469 = vld [vmem:[%s4 + $0x78] sm:$0xf]
        %v470 = vld [vmem:[%s4 + $0x7c] sm:$0xf]
        %v471 = vld [vmem:[%s4 + $0x80] sm:$0xf]
        %v472 = vld [vmem:[%s4 + $0x84] sm:$0xf]
        %v473 = vld [vmem:[%s4 + $0x88] sm:$0xf]
        %v474 = vld [vmem:[%s4 + $0x8c] sm:$0xf]
        %v475 = vld [vmem:[%s4 + $0x90] sm:$0xf]
        %v476 = vld [vmem:[%s4 + $0x94] sm:$0xf]
        %v477 = vld [vmem:[%s4 + $0x98] sm:$0xf]
        %v478 = vld [vmem:[%s4 + $0x9c] sm:$0xf]
        %v479 = vld [vmem:[%s4 + $0xa0] sm:$0xf]
        %v480 = vld [vmem:[%s4 + $0xa4] sm:$0xf]
        %v481 = vld [vmem:[%s4 + $0xa8] sm:$0xf]
        %v482 = vld [vmem:[%s4 + $0xac] sm:$0xf]
        %v483 = vld [vmem:[%s4 + $0xb0] sm:$0xf]
        %v484 = vld [vmem:[%s4 + $0xb4] sm:$0xf]
        %v485 = vld [vmem:[%s4 + $0xb8] sm:$0xf]
        %v486 = vld [vmem:[%s4 + $0xbc] sm:$0xf]
        %v487 = vld [vmem:[%s4 + $0xc0] sm:$0xf]
        %v488 = vld [vmem:[%s4 + $0xc4] sm:$0xf]
        %v489 = vld [vmem:[%s4 + $0xc8] sm:$0xf]
        %v490 = vld [vmem:[%s4 + $0xcc] sm:$0xf]
        %v491 = vld [vmem:[%s4 + $0xd0] sm:$0xf]
        %v492 = vld [vmem:[%s4 + $0xd4] sm:$0xf]
        %v493 = vld [vmem:[%s4 + $0xd8] sm:$0xf]
        %v494 = vld [vmem:[%s4 + $0xdc] sm:$0xf]
        %v495 = vld [vmem:[%s4 + $0xe0] sm:$0xf]
        %v496 = vld [vmem:[%s4 + $0xe4] sm:$0xf]
        %v497 = vld [vmem:[%s4 + $0xe8] sm:$0xf]
        %v498 = vld [vmem:[%s4 + $0xec] sm:$0xf]
        %v499 = vld [vmem:[%s4 + $0xf0] sm:$0xf]
        %v500 = vld [vmem:[%s4 + $0xf4] sm:$0xf]
        %v501 = vld [vmem:[%s4 + $0xf8] sm:$0xf]
        %v502 = vld [vmem:[%s4 + $0xfc] sm:$0xf]
        %v567 = vunpack.c.l.b16 %v439
        %v568 = vunpack.c.l.b16 %v440
        %v569 = vunpack.c.l.b16 %v441
        %v570 = vunpack.c.l.b16 %v442
        %v571 = vunpack.c.l.b16 %v443
        %v572 = vunpack.c.l.b16 %v444
        %v573 = vunpack.c.l.b16 %v445
        %v574 = vunpack.c.l.b16 %v446
        %v575 = vunpack.c.l.b16 %v447
        %v576 = vunpack.c.l.b16 %v448
        %v577 = vunpack.c.l.b16 %v449
        %v578 = vunpack.c.l.b16 %v450
        %v579 = vunpack.c.l.b16 %v451
        %v580 = vunpack.c.l.b16 %v452
        %v581 = vunpack.c.l.b16 %v453
        %v582 = vunpack.c.l.b16 %v454
        %v583 = vunpack.c.l.b16 %v455
        %v584 = vunpack.c.l.b16 %v456
        %v585 = vunpack.c.l.b16 %v457
        %v586 = vunpack.c.l.b16 %v458
        %v587 = vunpack.c.l.b16 %v459
        %v588 = vunpack.c.l.b16 %v460
        %v589 = vunpack.c.l.b16 %v461
        %v590 = vunpack.c.l.b16 %v462
        %v591 = vunpack.c.l.b16 %v463
        %v592 = vunpack.c.l.b16 %v464
        %v593 = vunpack.c.l.b16 %v465
        %v594 = vunpack.c.l.b16 %v466
        %v595 = vunpack.c.l.b16 %v467
        %v596 = vunpack.c.l.b16 %v468
        %v597 = vunpack.c.l.b16 %v469
        %v598 = vunpack.c.l.b16 %v470
        %v599 = vunpack.c.l.b16 %v471
        %v600 = vunpack.c.l.b16 %v472
        %v601 = vunpack.c.l.b16 %v473
        %v602 = vunpack.c.l.b16 %v474
        %v603 = vunpack.c.l.b16 %v475
        %v604 = vunpack.c.l.b16 %v476
        %v605 = vunpack.c.l.b16 %v477
        %v606 = vunpack.c.l.b16 %v478
        %v607 = vunpack.c.l.b16 %v479
        %v608 = vunpack.c.l.b16 %v480
        %v609 = vunpack.c.l.b16 %v481
        %v610 = vunpack.c.l.b16 %v482
        %v611 = vunpack.c.l.b16 %v483
        %v612 = vunpack.c.l.b16 %v484
        %v613 = vunpack.c.l.b16 %v485
        %v614 = vunpack.c.l.b16 %v486
        %v615 = vunpack.c.l.b16 %v487
        %v616 = vunpack.c.l.b16 %v488
        %v617 = vunpack.c.l.b16 %v489
        %v618 = vunpack.c.l.b16 %v490
        %v619 = vunpack.c.l.b16 %v491
        %v620 = vunpack.c.l.b16 %v492
        %v621 = vunpack.c.l.b16 %v493
        %v622 = vunpack.c.l.b16 %v494
        %v623 = vunpack.c.l.b16 %v495
        %v624 = vunpack.c.l.b16 %v496
        %v625 = vunpack.c.l.b16 %v497
        %v626 = vunpack.c.l.b16 %v498
        %v627 = vunpack.c.l.b16 %v499
        %v628 = vunpack.c.l.b16 %v500
        %v629 = vunpack.c.l.b16 %v501
        %v630 = vunpack.c.l.b16 %v502
        %v631 = vpack.c.b16 %v568, %v567
        %v632 = vpack.c.b16 %v570, %v569
        %v633 = vpack.c.b16 %v572, %v571
        %v634 = vpack.c.b16 %v574, %v573
        %v635 = vpack.c.b16 %v576, %v575
        %v636 = vpack.c.b16 %v578, %v577
        %v637 = vpack.c.b16 %v580, %v579
        %v638 = vpack.c.b16 %v582, %v581
        %v639 = vpack.c.b16 %v584, %v583
        %v640 = vpack.c.b16 %v586, %v585
        %v641 = vpack.c.b16 %v588, %v587
        %v642 = vpack.c.b16 %v590, %v589
        %v643 = vpack.c.b16 %v592, %v591
        %v644 = vpack.c.b16 %v594, %v593
        %v645 = vpack.c.b16 %v596, %v595
        %v646 = vpack.c.b16 %v598, %v597
        %v647 = vpack.c.b16 %v600, %v599
        %v648 = vpack.c.b16 %v602, %v601
        %v649 = vpack.c.b16 %v604, %v603
        %v650 = vpack.c.b16 %v606, %v605
        %v651 = vpack.c.b16 %v608, %v607
        %v652 = vpack.c.b16 %v610, %v609
        %v653 = vpack.c.b16 %v612, %v611
        %v654 = vpack.c.b16 %v614, %v613
        %v655 = vpack.c.b16 %v616, %v615
        %v656 = vpack.c.b16 %v618, %v617
        %v657 = vpack.c.b16 %v620, %v619
        %v658 = vpack.c.b16 %v622, %v621
        %v659 = vpack.c.b16 %v624, %v623
        %v660 = vpack.c.b16 %v626, %v625
        %v661 = vpack.c.b16 %v628, %v627
        %v662 = vpack.c.b16 %v630, %v629
        %695 = vmatpush.bf16.msra.mxu0 %v638
        %696 = vmatpush.bf16.msra.mxu0 %v637
        %697 = vmatpush.bf16.msra.mxu0 %v636
        %698 = vmatpush.bf16.msra.mxu0 %v635
        %699 = vmatpush.bf16.msra.mxu0 %v634
        %700 = vmatpush.bf16.msra.mxu0 %v633
        %701 = vmatpush.bf16.msra.mxu0 %v632
        %702 = vmatpush.bf16.msra.mxu0 %v631
        %703 = vmatmul.bf16.gmra.mxu0 %v435
        %v704 = vpop.f32.mrf.mxu0
        %v705 = vadd.f32 0.0, %v704
        %v706 = vpop.f32.mrf.mxu0
        %707 = vdwg.mxu0
        %708 = vmatpush.bf16.msra.mxu0 %v646
        %709 = vmatpush.bf16.msra.mxu0 %v645
        %710 = vmatpush.bf16.msra.mxu0 %v644
        %711 = vmatpush.bf16.msra.mxu0 %v643
        %712 = vmatpush.bf16.msra.mxu0 %v642
        %713 = vmatpush.bf16.msra.mxu0 %v641
        %714 = vmatpush.bf16.msra.mxu0 %v640
        %715 = vmatpush.bf16.msra.mxu0 %v639
        %716 = vmatmul.bf16.gmra.mxu0 %v436
        %v717 = vpop.f32.mrf.mxu0
        %v718 = vadd.f32 %v705, %v717
        %v719 = vpop.f32.mrf.mxu0
        %720 = vdwg.mxu0
        %721 = vmatpush.bf16.msra.mxu0 %v654
        %722 = vmatpush.bf16.msra.mxu0 %v653
        %723 = vmatpush.bf16.msra.mxu0 %v652
        %724 = vmatpush.bf16.msra.mxu0 %v651
        %725 = vmatpush.bf16.msra.mxu0 %v650
        %726 = vmatpush.bf16.msra.mxu0 %v649
        %727 = vmatpush.bf16.msra.mxu0 %v648
        %728 = vmatpush.bf16.msra.mxu0 %v647
        %729 = vmatmul.bf16.gmra.mxu0 %v437
        %v730 = vpop.f32.mrf.mxu0
        %v731 = vadd.f32 %v718, %v730
        %v732 = vpop.f32.mrf.mxu0
        %733 = vdwg.mxu0
        %734 = vmatpush.bf16.msra.mxu0 %v662
        %735 = vmatpush.bf16.msra.mxu0 %v661
        %736 = vmatpush.bf16.msra.mxu0 %v660
        %737 = vmatpush.bf16.msra.mxu0 %v659
        %738 = vmatpush.bf16.msra.mxu0 %v658
        %739 = vmatpush.bf16.msra.mxu0 %v657
        %740 = vmatpush.bf16.msra.mxu0 %v656
        %741 = vmatpush.bf16.msra.mxu0 %v655
        %742 = vmatmul.bf16.gmra.mxu0 %v438
        %v743 = vpop.f32.mrf.mxu0
        %v744 = vadd.f32 %v731, %v743
        %v745 = vpop.f32.mrf.mxu0
        %746 = vdwg.mxu0
        %747 = vst.msk [vmem:[%s228] sm:$0xff] %vm255, %v744
        %s748 = sand.u32 %s142, 1
        %s749 = scalar_lea.sflag [#allocation3], %s748
        %s750 = sand.u32 %s142, 1
        %s751 = smul.addr %s750, 8
        %s752 = scalar_lea.vmem [#allocation2], %s751
        // Predicated region
        $region41: #{tpu_custom_call.1} parent=39 // pred_check
          %p753 = pneg %p152
        $region42: #{tpu_custom_call.1} parent=39 // pred_check_branch
          %755 = sbr.rel (%p753) target = $region44
        $region43: #{tpu_custom_call.1} parent=39 // pred_region
          %757 = vsyncadd %s749, 0
          %s758 = smul.addr %s19, 8
          %s759 = scalar_lea.hbm %s5, %s758
          %s761 = sshll.u32 %s752, 4
          %s762 = int_to_ptr.vmem [resolvable:$true] %s761
          %s763 = sshll.u32 %s759, 4
          %s764 = int_to_ptr.hbm [resolvable:$true] %s763
          %766 = dma.vmem_to_hbm [thread:$0]  %s762, 128, %s764, %s749
        $region44: #{tpu_custom_call.1} parent=39 // pred_fallthru
          _
      $region40: #{tpu_custom_call.1} parent=5 // pred_fallthru
        _
      %p767 = scmp.le.s32.totalorder 2, %s14
      // Predicated region
      $region45: #{tpu_custom_call.1} parent=5 // pred_check
        %p768 = pneg %p767
      $region46: #{tpu_custom_call.1} parent=5 // pred_check_branch
        %770 = sbr.rel (%p768) target = $region48
      $region47: #{tpu_custom_call.1} parent=5 // pred_region
        %s771 = ssub.s32 %s14, 2
        // Predicated region
        $region49: #{tpu_custom_call.1} parent=47 // pred_check
          %p772 = pneg %p158
        $region50: #{tpu_custom_call.1} parent=47 // pred_check_branch
          %774 = sbr.rel (%p772) target = $region52
        $region51: #{tpu_custom_call.1} parent=47 // pred_region
          %s775 = sand.u32 %s143, 1
          %s776 = scalar_lea.sflag [#allocation3], %s775
          %s777 = sand.u32 %s143, 1
          %s778 = smul.addr %s777, 8
          %s779 = scalar_lea.vmem [#allocation2], %s778
          %781 = dma.done %s776, 128
        $region52: #{tpu_custom_call.1} parent=47 // pred_fallthru
          _
      $region48: #{tpu_custom_call.1} parent=5 // pred_fallthru
        _
    $region6: #{tpu_custom_call.1} parent=1 // loop_footer
      %s18 = sadd.s32 1, %s14
    $region7: #{tpu_custom_call.1} parent=1 // loop_footer_branch
      %13 = sbr.rel target = $region3
    $region8: #{tpu_custom_call.1} parent=1 // loop_exit
      _
    %782 = vsyncpa [#allocation3], 1
    %s783 = scalar_lea.sflag [#allocation3], 1
    %784 = vsyncpa %s783, 1

</llo_original>
